<compile_context>
chip_gen: v7x
topology: tpu7x:2x2x1
jax: 0.10.0
libtpu: 0.0.40
codegen_flags: <defaults>
</compile_context>

<pallas_src>
import jax
import jax.numpy as jnp
from jax.experimental import pallas as pl
from jax.experimental.pallas import tpu as pltpu


def _copy_kernel(x_ref, o_ref):
    # Pure pass-through: VMEM load -> VMEM store (mem-bound, no compute).
    o_ref[...] = x_ref[...]


_TARGET_BLOCK_BYTES = 4 * 1024 * 1024      # ~4 MiB per block; 4x (in+out, double-buffered) = 16 MiB
_VMEM_LIMIT_BYTES = 32 * 1024 * 1024       # headroom on v7x (64 MiB physical), trivial on v5e/v6e
_SMALL_FAST_PATH_BYTES = 256 * 1024        # below this a pallas launch is pure overhead
_FALLBACK_COLS = 1024                      # lane-dense column count for the padded ragged path


def identity(x):
    """nn.Identity forward: return the input unchanged (zero-copy)."""
    return x


def _lane_dense_2d(n):
    """Factor n elements as (rows, cols) with cols a large multiple of 128, else None."""
    for cols in (8192, 4096, 2048, 1024, 512, 256, 128):
        if n % cols == 0:
            return n // cols, cols
    return None


def _tiled_copy_2d(x2, donate_input=False):
    """Tiled, pipelined VMEM copy of a (rows, cols) array with cols % 128 == 0."""
    rows, cols = x2.shape
    dtype = x2.dtype
    itemsize = dtype.itemsize
    sublane = max(8, 32 // itemsize)  # 8 for 32-bit, 16 for 16-bit, 32 for 8-bit dtypes

    target_rows = max(1, _TARGET_BLOCK_BYTES // (cols * itemsize))
    if rows <= sublane:
        block_rows = rows  # full-extent block is always legal
    else:
        block_rows = max(sublane, (min(rows, target_rows) // sublane) * sublane)
        if block_rows >= rows and rows >= 2 * sublane:
            # Split into >= 2 sublane-aligned blocks so the "parallel" grid axis
            # has work to shard across v7x's two TensorCores.
            half = (rows + 1) // 2
            block_rows = max(sublane, ((half + sublane - 1) // sublane) * sublane)

    grid = (pl.cdiv(rows, block_rows),)

    return pl.pallas_call(
        _copy_kernel,
        out_shape=jax.ShapeDtypeStruct((rows, cols), dtype),
        grid_spec=pltpu.PrefetchScalarGridSpec(
            num_scalar_prefetch=0,
            grid=grid,
            in_specs=[pl.BlockSpec((block_rows, cols), lambda i: (i, 0))],
            out_specs=pl.BlockSpec((block_rows, cols), lambda i: (i, 0)),
        ),
        compiler_params=pltpu.CompilerParams(
            dimension_semantics=("parallel",),
            vmem_limit_bytes=_VMEM_LIMIT_BYTES,
        ),
        input_output_aliases=({0: 0} if donate_input else {}),
    )(x2)


def identity_copy(x, *, force_kernel=False, donate_input=False):
    """Pallas copy: returns a fresh buffer equal to `x` (same shape & dtype).

    Identity semantics never require this; use `identity(x)` unless a distinct
    output buffer is explicitly needed.
    """
    orig_shape = x.shape
    dtype = x.dtype
    n = x.size
    if n == 0:
        return x
    if (n * dtype.itemsize) < _SMALL_FAST_PATH_BYTES and not force_kernel:
        # Small tensors: kernel launch + single-step overhead dominates.
        return jnp.copy(x)

    factored = _lane_dense_2d(n)
    if factored is not None:
        rows, cols = factored
        out2 = _tiled_copy_2d(x.reshape(rows, cols), donate_input=donate_input)
        return out2.reshape(orig_shape)

    # Ragged fallback (n not a multiple of 128): pad the flat array up to a
    # multiple of _FALLBACK_COLS, copy lane/sublane-dense tiles, slice back.
    rows = (n + _FALLBACK_COLS - 1) // _FALLBACK_COLS
    padded = rows * _FALLBACK_COLS
    xf = x.reshape(-1)
    xf = jnp.pad(xf, (0, padded - n))
    out2 = _tiled_copy_2d(xf.reshape(rows, _FALLBACK_COLS))
    return out2.reshape(-1)[:n].reshape(orig_shape)


if __name__ == "__main__":
    key = jax.random.PRNGKey(0)
    x = jax.random.normal(key, (2, 4, 16, 16), dtype=jnp.float32)

    # Default nn.Identity semantics: zero-copy pass-through.
    y = identity(x)
    assert y is x

    # Exercise the Pallas copy kernel (forced: this demo shape is below the
    # small-tensor fast-path threshold).
    y2 = identity_copy(x, force_kernel=True)
    jax.block_until_ready(y2)
    assert y2.shape == x.shape and y2.dtype == x.dtype
    assert bool(jnp.array_equal(y2, x))

    # Exercise the fixed ragged (non-multiple-of-128) fallback path.
    x3 = jax.random.normal(key, (3, 5, 7), dtype=jnp.float32)  # 105 elements
    y3 = identity_copy(x3, force_kernel=True)
    jax.block_until_ready(y3)
    assert y3.shape == x3.shape and y3.dtype == x3.dtype
    assert bool(jnp.array_equal(y3, x3))

    print("KERNEL_OK")
</pallas_src>

<mosaic_0001>
module attributes {stable_mosaic.version = 11 : i64} {
  func.func @_copy_kernel(%arg0: i32, %arg1: memref<1x2048xf32, #tpu.memory_space<vmem>>, %arg2: memref<1x2048xf32, #tpu.memory_space<vmem>>) attributes {dimension_semantics = [#tpu.dimension_semantics<parallel>], iteration_bounds = array<i64: 1>, scalar_prefetch = 0 : i64, scratch_operands = 0 : i64, tpu.core_type = #tpu.core_type<tc>, window_params = [{transform_indices = @transform_0, window_bounds = array<i64: 1, 2048>}, {transform_indices = @transform_1, window_bounds = array<i64: 1, 2048>}]} {
    %c0 = arith.constant 0 : index
    %c0_0 = arith.constant 0 : index
    %0 = vector.load %arg1[%c0, %c0_0] : memref<1x2048xf32, #tpu.memory_space<vmem>>, vector<1x2048xf32>
    %c0_1 = arith.constant 0 : index
    %c0_2 = arith.constant 0 : index
    %1 = vector.load %arg2[%c0_1, %c0_2] : memref<1x2048xf32, #tpu.memory_space<vmem>>, vector<1x2048xf32>
    tpu.vector_store %arg2[%c0_1, %c0_2], %0 {strides = array<i32>} : memref<1x2048xf32, #tpu.memory_space<vmem>>, vector<1x2048xf32>,
    return
  }
  func.func @transform_0(%arg0: i32) -> (i32, i32) {
    %c0_i32 = arith.constant 0 : i32
    %c0_i32_0 = arith.constant 0 : i32
    return %arg0, %c0_i32 : i32, i32
  }
  func.func @transform_1(%arg0: i32) -> (i32, i32) {
    %c0_i32 = arith.constant 0 : i32
    %c0_i32_0 = arith.constant 0 : i32
    return %arg0, %c0_i32 : i32, i32
  }
}

</mosaic_0001>

<llo_original>
// kernel: tpu_custom_call.1
$region0: #{tpu_custom_call.1}
  #allocation0 [shape = 'u32[]', space=smem, size = 0x4, offset = 0x4, fixed_abs, tag = 'smem constant byte address 0x4 - core index']
  #allocation1 [shape = 'u32[144,128]{1,0:T(1,128)}', space=vmem, size = 0x12000, scoped, tag = 'internal scratch']
  %s0 = inlined_call_operand.hbm [shape: f32[1,2048], index: 0, kind: input, shape index: {}]
  %s1 = inlined_call_operand.hbm [shape: f32[1,2048], index: 1, kind: output, shape index: {}]
  %s2 = sld [smem:[#allocation0]]
  $region18: #{tpu_custom_call.1} parent=0
    _
  %s4 = ssub.s32 1, %s2
  %s5 = scalar_select 0, %s4, %s2
  $region1: #{tpu_custom_call.1} parent=0
    #allocation2 [shape = 'u8[8192]{0}', space=vmem, size = 0x2000, scoped, tag = 'input window, operand 0, single buffered']
    #allocation3 [shape = 's32[1]{0}', space=sflag, size = 0x4, scoped, tag = 'scoped memory for tpu_custom_call.1']
    #allocation4 [shape = 's32[1]{0}', space=sflag, size = 0x4, scoped, tag = 'scoped memory for tpu_custom_call.1']
    #allocation5 [shape = 'u8[8192]{0}', space=vmem, size = 0x2000, scoped, tag = 'output window, operand 0, single buffered']
    %6 = vsyncpa [#allocation3], 0
    %7 = vsyncpa [#allocation4], 0
    // Predicated region
    $region2: #{tpu_custom_call.1} parent=1 // pred_check
      _
    $region3: #{tpu_custom_call.1} parent=1 // pred_check_branch
      %9 = sbr.rel (0) target = $region5
    $region4: #{tpu_custom_call.1} parent=1 // pred_region
      %s11 = ssub.s32 256, 256
      %12 = vsyncadd [#allocation3], %s11
      %s14 = sshll.u32 [#allocation2], 4
      %s15 = int_to_ptr.vmem [resolvable:$true] %s14
      %17 = dma.hbm_to_vmem [thread:$0]  %s0, 256, %s15, [#allocation3]
    $region5: #{tpu_custom_call.1} parent=1 // pred_fallthru
      _
    // Predicated region
    $region6: #{tpu_custom_call.1} parent=1 // pred_check
      _
    $region7: #{tpu_custom_call.1} parent=1 // pred_check_branch
      %19 = sbr.rel (0) target = $region9
    $region8: #{tpu_custom_call.1} parent=1 // pred_region
      %20 = dma.done [#allocation3], 256
    $region9: #{tpu_custom_call.1} parent=1 // pred_fallthru
      _
    %v21 = vld [vmem:[#allocation2] sm:$0xff]
    %v22 = vld [vmem:[#allocation2 + $0x8] sm:$0xff]
    %23 = vst [vmem:[#allocation5] sm:$0xff] %v21
    %24 = vst [vmem:[#allocation5 + $0x8] sm:$0xff] %v22
    // Predicated region
    $region10: #{tpu_custom_call.1} parent=1 // pred_check
      _
    $region11: #{tpu_custom_call.1} parent=1 // pred_check_branch
      %26 = sbr.rel (0) target = $region13
    $region12: #{tpu_custom_call.1} parent=1 // pred_region
      %s28 = ssub.s32 256, 256
      %29 = vsyncadd [#allocation4], %s28
      %s31 = sshll.u32 [#allocation5], 4
      %s32 = int_to_ptr.vmem [resolvable:$true] %s31
      %34 = dma.vmem_to_hbm [thread:$0]  %s32, 256, %s1, [#allocation4]
    $region13: #{tpu_custom_call.1} parent=1 // pred_fallthru
      _
    // Predicated region
    $region14: #{tpu_custom_call.1} parent=1 // pred_check
      _
    $region15: #{tpu_custom_call.1} parent=1 // pred_check_branch
      %36 = sbr.rel (0) target = $region17
    $region16: #{tpu_custom_call.1} parent=1 // pred_region
      %37 = dma.done [#allocation4], 256
    $region17: #{tpu_custom_call.1} parent=1 // pred_fallthru
      _
    %38 = vsyncpa [#allocation3], 1
    %39 = vsyncpa [#allocation4], 1

</llo_original>
